<compile_context>
chip_gen: v7x
topology: tpu7x:2x2x1
jax: 0.10.0
libtpu: 0.0.40
codegen_flags: <defaults>
</compile_context>

<pallas_src>
import jax
import jax.numpy as jnp
from jax import lax
from jax.experimental import pallas as pl
from jax.experimental.pallas import tpu as pltpu

_SUBLANE = 8
_INNER_PRODUCT_BYTES = 512 * 1024   # live (rc, D) product kept to ~512 KiB


def _make_linear_kernel(tb: int, rc: int):
    """Build the kernel for a (tb, D) x tile, reducing `rc` rows per inner step."""
    nfull = tb // rc
    rem = tb - nfull * rc            # static (tb, rc are Python ints)

    def kernel(x_ref, w_ref, b_ref, o_ref):
        # x_ref: (TB, D) VMEM, w_ref: (1, D) VMEM (resident across grid),
        # b_ref: (1, 1) SMEM scalar, o_ref: (TB, 1) VMEM.
        w = w_ref[...]               # (1, D), broadcasts over rows (hoisted out of loop)
        b = b_ref[0, 0]

        def row_chunk(off, size):
            xa = x_ref[pl.ds(off, size), :]                       # (size, D)
            # VPU elementwise multiply + XLU lane reduce; no MXU involved.
            acc = jnp.sum(xa * w, axis=-1, keepdims=True)         # (size, 1) f32
            o_ref[pl.ds(off, size), :] = (acc + b).astype(o_ref.dtype)

        def body(r, carry):
            off = r * rc
            if rc % _SUBLANE == 0:                                # static check
                off = pl.multiple_of(off, _SUBLANE)               # aligned sublane slice
            row_chunk(off, rc)
            return carry

        # Real loop (not a Python for) so the (rc, D) product's live range is bounded
        # per iteration and never spills a tile-sized temp to VMEM.
        lax.fori_loop(0, nfull, body, 0)
        if rem > 0:                                               # static remainder
            row_chunk(nfull * rc, rem)

    return kernel


def _vmem_budget_bytes():
    """(vmem_limit_bytes, per_x_buffer_byte_target), adapted to the chip generation."""
    try:
        cap = int(pltpu.get_tpu_info().vmem_capacity_bytes)
    except Exception:
        cap = 64 * 1024 * 1024       # conservative fallback: v7x's 64 MiB per TC
    # v7x (64 MiB): 48 MiB limit; v5e/v6e (128 MiB): 64 MiB limit.
    vmem_limit = min((cap * 3) // 4, 64 * 1024 * 1024)
    # x is double-buffered; keep ~20% of the limit free for weight/output/spill.
    tile_target = (vmem_limit * 2) // 5
    return vmem_limit, tile_target


def _choose_tiles(batch: int, input_dim: int, tile_target_bytes: int):
    """Batch tile TB (sized by bytes) and inner row-chunk RC (bounds live product)."""
    bytes_per_row = input_dim * 4    # f32
    rows = max(_SUBLANE, tile_target_bytes // bytes_per_row)
    tb = (rows // _SUBLANE) * _SUBLANE
    if tb >= batch:
        tb = batch                   # single full-array block is always a legal spec
    if tb < _SUBLANE:
        rc = tb                      # tiny batch: one chunk
    else:
        rc_rows = max(_SUBLANE, _INNER_PRODUCT_BYTES // bytes_per_row)
        rc = min((rc_rows // _SUBLANE) * _SUBLANE, tb)
    return tb, max(rc, 1)


def dummy_model_forward(x, weight, bias):
    """Forward pass of DummyModel.

    Args:
        x:      (batch, input_dim) float32
        weight: (1, input_dim) float32   (PyTorch nn.Linear weight layout, kept as-is)
        bias:   (1,) float32

    Returns:
        (batch, 1) float32
    """
    B, D = x.shape
    b_scalar = bias.reshape(1, 1).astype(x.dtype)   # (1, 1) -> SMEM scalar

    vmem_limit, tile_target = _vmem_budget_bytes()
    TB, RC = _choose_tiles(B, D, tile_target)
    grid = (pl.cdiv(B, TB),)

    cost = pl.CostEstimate(
        flops=2 * B * D,
        transcendentals=0,
        bytes_accessed=4 * (B * D + B + D + 1),
    )

    return pl.pallas_call(
        _make_linear_kernel(TB, RC),
        out_shape=jax.ShapeDtypeStruct((B, 1), x.dtype),
        grid_spec=pltpu.PrefetchScalarGridSpec(
            num_scalar_prefetch=0,
            grid=grid,
            in_specs=[
                # Streamed x tiles (double-buffered).  If an xprof trace on v7x still
                # shows exposed DMA, add pipeline_mode=pl.Buffered(3) here.
                pl.BlockSpec((TB, D), lambda i: (i, 0)),
                # Weight: same block every step -> fetched once, stays resident.
                pl.BlockSpec((1, D), lambda i: (0, 0)),
                # Bias scalar in SMEM.
                pl.BlockSpec(memory_space=pltpu.MemorySpace.SMEM),
            ],
            # Lane-sparse (TB, 1) output accepted knowingly (see header comment).
            out_specs=pl.BlockSpec((TB, 1), lambda i: (i, 0)),
        ),
        compiler_params=pltpu.CompilerParams(
            dimension_semantics=("parallel",),   # lets v7x shard steps across 2 TCs
            vmem_limit_bytes=vmem_limit,
        ),
        cost_estimate=cost,
    )(x, weight, b_scalar)


if __name__ == "__main__":
    batch = 8
    input_dim = 32

    key = jax.random.PRNGKey(0)
    kx, kw, kb = jax.random.split(key, 3)

    # Deterministic parameter init (mimicking nn.Linear's uniform(-1/sqrt(d), 1/sqrt(d))).
    bound = 1.0 / jnp.sqrt(jnp.float32(input_dim))
    weight = jax.random.uniform(kw, (1, input_dim), jnp.float32, -bound, bound)
    bias = jax.random.uniform(kb, (1,), jnp.float32, -bound, bound)

    x = jax.random.normal(kx, (batch, input_dim), jnp.float32)

    out = jax.block_until_ready(dummy_model_forward(x, weight, bias))

    # Sanity check against plain-JAX reference.
    ref = x @ weight.T + bias
    assert out.shape == (batch, 1)
    assert jnp.allclose(out, ref, atol=1e-5, rtol=1e-5)

    print("KERNEL_OK")
</pallas_src>

<mosaic_0001>
module attributes {stable_mosaic.version = 11 : i64} {
  func.func @kernel(%arg0: i32, %arg1: memref<8x32xf32, #tpu.memory_space<vmem>>, %arg2: memref<1x32xf32, #tpu.memory_space<vmem>>, %arg3: memref<1x1xf32, #tpu.memory_space<smem>>, %arg4: memref<8x1xf32, #tpu.memory_space<vmem>>) attributes {dimension_semantics = [#tpu.dimension_semantics<parallel>], iteration_bounds = array<i64: 1>, scalar_prefetch = 0 : i64, scratch_operands = 0 : i64, tpu.core_type = #tpu.core_type<tc>, window_params = [{transform_indices = @transform_0, window_bounds = array<i64: 8, 32>}, {pipeline_mode = #tpu.pipeline_mode<synchronous>, transform_indices = @transform_1, window_bounds = array<i64: 1, 32>}, {transform_indices = @transform_2, window_bounds = array<i64: 1, 1>}, {transform_indices = @transform_3, window_bounds = array<i64: 8, 1>}]} {
    %c0 = arith.constant 0 : index
    %c0_0 = arith.constant 0 : index
    %0 = vector.load %arg2[%c0, %c0_0] : memref<1x32xf32, #tpu.memory_space<vmem>>, vector<1x32xf32>
    %c0_1 = arith.constant 0 : index
    %c0_2 = arith.constant 0 : index
    %1 = memref.load %arg3[%c0_1, %c0_2] : memref<1x1xf32, #tpu.memory_space<smem>>
    %c0_i32 = arith.constant 0 : i32
    %c8_i32 = arith.constant 8 : i32
    %2 = arith.muli %c0_i32, %c8_i32 : i32
    %3 = tpu.assume_multiple %2, 8 : i32
    %4 = arith.index_cast %3 : i32 to index
    %c0_3 = arith.constant 0 : index
    %5 = vector.load %arg1[%4, %c0_3] : memref<8x32xf32, #tpu.memory_space<vmem>>, vector<8x32xf32>
    %6 = vector.broadcast %0 : vector<1x32xf32> to vector<8x32xf32>
    %7 = arith.mulf %5, %6 : vector<8x32xf32>
    %cst = arith.constant dense<0.000000e+00> : vector<8xf32>
    %8 = vector.multi_reduction <add>, %7, %cst [1] : vector<8x32xf32> to vector<8xf32>
    %9 = vector.shape_cast %8 : vector<8xf32> to vector<8x1xf32>
    %10 = vector.broadcast %1 : f32 to vector<8x1xf32>
    %11 = arith.addf %9, %10 : vector<8x1xf32>
    %12 = arith.index_cast %3 : i32 to index
    %c0_4 = arith.constant 0 : index
    %13 = vector.load %arg4[%12, %c0_4] : memref<8x1xf32, #tpu.memory_space<vmem>>, vector<8x1xf32>
    tpu.vector_store %arg4[%12, %c0_4], %11 {strides = array<i32>} : memref<8x1xf32, #tpu.memory_space<vmem>>, vector<8x1xf32>,
    %c1_i32 = arith.constant 1 : i32
    return
  }
  func.func @transform_0(%arg0: i32) -> (i32, i32) {
    %c0_i32 = arith.constant 0 : i32
    %c0_i32_0 = arith.constant 0 : i32
    return %arg0, %c0_i32 : i32, i32
  }
  func.func @transform_1(%arg0: i32) -> (i32, i32) {
    %c0_i32 = arith.constant 0 : i32
    %c0_i32_0 = arith.constant 0 : i32
    %c0_i32_1 = arith.constant 0 : i32
    return %c0_i32, %c0_i32_0 : i32, i32
  }
  func.func @transform_2(%arg0: i32) -> (i32, i32) {
    %c0_i32 = arith.constant 0 : i32
    %c0_i32_0 = arith.constant 0 : i32
    %c0_i32_1 = arith.constant 0 : i32
    return %c0_i32, %c0_i32_0 : i32, i32
  }
  func.func @transform_3(%arg0: i32) -> (i32, i32) {
    %c0_i32 = arith.constant 0 : i32
    %c0_i32_0 = arith.constant 0 : i32
    return %arg0, %c0_i32 : i32, i32
  }
}

</mosaic_0001>

<llo_original>
// kernel: tpu_custom_call.1
$region0: #{tpu_custom_call.1}
  #allocation0 [shape = 'u32[]', space=smem, size = 0x4, offset = 0x4, fixed_abs, tag = 'smem constant byte address 0x4 - core index']
  #allocation1 [shape = 'u32[144,128]{1,0:T(1,128)}', space=vmem, size = 0x12000, scoped, tag = 'internal scratch']
  #allocation2 [shape = 'f32[1,1]{1,0:T(1,128)S(6)}', space=smem, size = 0x200, scoped, tag = 'scoped memory for tpu_custom_call.1']
  %s0 = inlined_call_operand.hbm [shape: f32[8,32], index: 0, kind: input, shape index: {}]
  %s1 = inlined_call_operand.vmem [shape: f32[1,32], index: 1, kind: input, shape index: {}]
  %s2 = inlined_call_operand.<no memory space> [shape: f32[1,1], index: 2, kind: input, shape index: {}]
  %s3 = inlined_call_operand.vmem [shape: f32[8,1], index: 3, kind: output, shape index: {}]
  %s4 = sld [smem:[#allocation0]]
  $region26: #{tpu_custom_call.1} parent=0
    _
  %s6 = ssub.s32 1, %s4
  %s7 = scalar_select 0, %s6, %s4
  %8 = sst [smem:[#allocation2]] %s2
  $region1: #{tpu_custom_call.1} parent=0
    #allocation3 [shape = 'u8[4096]{0}', space=vmem, size = 0x1000, scoped, tag = 'input window, operand 0, single buffered']
    #allocation4 [shape = 's32[1]{0}', space=sflag, size = 0x4, scoped, tag = 'scoped memory for tpu_custom_call.1']
    %9 = vsyncpa [#allocation4], 0
    // Predicated region
    $region2: #{tpu_custom_call.1} parent=1 // pred_check
      _
    $region3: #{tpu_custom_call.1} parent=1 // pred_check_branch
      %11 = sbr.rel (0) target = $region5
    $region4: #{tpu_custom_call.1} parent=1 // pred_region
      %s13 = ssub.s32 128, 128
      %14 = vsyncadd [#allocation4], %s13
      %s16 = sshll.u32 [#allocation3], 4
      %s17 = int_to_ptr.vmem [resolvable:$true] %s16
      %19 = dma.hbm_to_vmem [thread:$0]  %s0, 128, %s17, [#allocation4]
    $region5: #{tpu_custom_call.1} parent=1 // pred_fallthru
      _
    // Predicated region
    $region6: #{tpu_custom_call.1} parent=1 // pred_check
      _
    $region7: #{tpu_custom_call.1} parent=1 // pred_check_branch
      %21 = sbr.rel (0) target = $region9
    $region8: #{tpu_custom_call.1} parent=1 // pred_region
      _
    $region9: #{tpu_custom_call.1} parent=1 // pred_fallthru
      _
    // Predicated region
    $region10: #{tpu_custom_call.1} parent=1 // pred_check
      _
    $region11: #{tpu_custom_call.1} parent=1 // pred_check_branch
      %23 = sbr.rel (0) target = $region13
    $region12: #{tpu_custom_call.1} parent=1 // pred_region
      _
    $region13: #{tpu_custom_call.1} parent=1 // pred_fallthru
      _
    // Predicated region
    $region14: #{tpu_custom_call.1} parent=1 // pred_check
      _
    $region15: #{tpu_custom_call.1} parent=1 // pred_check_branch
      %25 = sbr.rel (0) target = $region17
    $region16: #{tpu_custom_call.1} parent=1 // pred_region
      %26 = dma.done [#allocation4], 128
    $region17: #{tpu_custom_call.1} parent=1 // pred_fallthru
      _
    %v27 = vld [vmem:[%s1] sm:$0x1]
    %s28 = sld [smem:[#allocation2]]
    %v29 = vld [vmem:[#allocation3] sm:$0xff]
    %v31 = vlaneseq
    %v32 = vshrl.u32 %v31, 7
    %v33 = vsub.s32 0, %v32
    %v34 = vrot.slane %v27, %v33
    %v36 = vmul.f32 %v29, %v34
    %vm37 = vcmask 261120
    %v38 = vsel %vm37, %v36, 0.0
    %39 = vadd.xlane.f32.xlu0 %v38
    %v40 = vpop.xlane.xlu0 %39
    %v41 = vstv %s28
    %v42 = vadd.f32 %v40, %v41
    %vm43 = vcmask 7168
    %44 = vst.msk [vmem:[%s3] sm:$0xff] %vm43, %v42
    // Predicated region
    $region18: #{tpu_custom_call.1} parent=1 // pred_check
      _
    $region19: #{tpu_custom_call.1} parent=1 // pred_check_branch
      %46 = sbr.rel (0) target = $region21
    $region20: #{tpu_custom_call.1} parent=1 // pred_region
      _
    $region21: #{tpu_custom_call.1} parent=1 // pred_fallthru
      _
    // Predicated region
    $region22: #{tpu_custom_call.1} parent=1 // pred_check
      _
    $region23: #{tpu_custom_call.1} parent=1 // pred_check_branch
      %48 = sbr.rel (0) target = $region25
    $region24: #{tpu_custom_call.1} parent=1 // pred_region
      _
    $region25: #{tpu_custom_call.1} parent=1 // pred_fallthru
      _
    %49 = vsyncpa [#allocation4], 1

</llo_original>
